<compile_context>
chip_gen: v7x
topology: tpu7x:2x2x1
jax: 0.10.0
libtpu: 0.0.40
codegen_flags: <defaults>
</compile_context>

<pallas_src>
import functools

import jax
import jax.numpy as jnp
from jax.experimental import pallas as pl
from jax.experimental.pallas import tpu as pltpu

LANES = 128
SMALL_BYPASS_BYTES = 256 * 1024      # below this, plain jnp (lets XLA fuse it)
MIN_SPLIT_BYTES = 1 * 1024 * 1024    # only split for 2 TCs if each half >= 1 MiB


def _sublane_pack(dtype):
    itemsize = jnp.dtype(dtype).itemsize
    return {4: 8, 2: 16, 1: 32}.get(itemsize, 8)


def _round_up(a, m):
    return ((a + m - 1) // m) * m


def _chip_config():
    """Return (target_block_bytes, vmem_limit_bytes or None, num_tensorcores)."""
    kind = ""
    try:
        kind = jax.devices()[0].device_kind.lower()
    except Exception:
        pass
    if "v7" in kind:
        # 3.2 TB/s HBM: big blocks to amortize per-step overhead. 2 arrays x
        # 2 buffers x 6 MiB = 24 MiB; raise the scoped-VMEM limit with headroom
        # (64 MiB physical on v7x).
        return 6 * 1024 * 1024, 40 << 20, 2
    if "v6" in kind:
        # 4 MiB blocks -> 16 MiB total across in/out double buffers, under the
        # 32 MiB scoped-VMEM default; no flag needed.
        return 4 * 1024 * 1024, None, 1
    # v5e (16 MiB scoped-VMEM default) and unknown chips: conservative 2 MiB.
    return 2 * 1024 * 1024, None, 1


def _int_pow(x, p):
    """x**p for positive integer p via exponentiation-by-squaring (VPU muls only)."""
    result = None
    base = x
    while p > 0:
        if p & 1:
            result = base if result is None else result * base
        p >>= 1
        if p:
            base = base * base
    return result


def _apply_pow(x, power):
    """Specialized elementwise power; exact for any integer exponent (neg. bases ok)."""
    p = float(power)
    if p.is_integer():
        ip = int(p)
        if ip == 0:
            return jnp.ones_like(x)
        if ip > 0:
            return _int_pow(x, ip)
        return 1.0 / _int_pow(x, -ip)
    if p == 0.5:
        return jnp.sqrt(x)
    if p == -0.5:
        return jax.lax.rsqrt(x)
    return jnp.power(x, p)  # general irrational exponent (EUP exp/log path)


def _is_specialized(power):
    p = float(power)
    return p.is_integer() or p in (0.5, -0.5)


def _pow_kernel(x_ref, o_ref, *, power, compute_dtype):
    x = x_ref[...].astype(compute_dtype)   # single upcast (no-op if same dtype)
    o_ref[...] = _apply_pow(x, power).astype(o_ref.dtype)


def _pow_slab(slab, power, compute_dtype):
    """Run the Pallas kernel on a lane-dense (rows, 128) slab."""
    rows, lanes = slab.shape
    dtype = slab.dtype
    itemsize = jnp.dtype(dtype).itemsize
    sub = _sublane_pack(dtype)
    target_bytes, vmem_limit, num_tc = _chip_config()

    target_rows = _round_up(max(sub, target_bytes // (lanes * itemsize)), sub)
    if rows <= target_rows:
        block_rows = rows        # block == full dim: always layout-legal, grid=1
    else:
        block_rows = target_rows  # multiple of sublane pack; last block partial

    # Only on 2-TensorCore chips (v7x): keep grid >= 2 so both cores get work
    # via the "parallel" axis, but never shrink a half below ~1 MiB of DMA.
    if num_tc >= 2 and block_rows == rows:
        half = _round_up(pl.cdiv(rows, 2), sub)
        if half < rows and half * lanes * itemsize >= MIN_SPLIT_BYTES:
            block_rows = half

    grid = (pl.cdiv(rows, block_rows),)

    n = rows * lanes
    cost = pl.CostEstimate(
        flops=2 * n,
        transcendentals=0 if _is_specialized(power) else 2 * n,
        bytes_accessed=2 * n * itemsize,
    )

    cp_kwargs = dict(dimension_semantics=("parallel",))
    if vmem_limit is not None:
        cp_kwargs["vmem_limit_bytes"] = vmem_limit

    kernel = functools.partial(_pow_kernel, power=power, compute_dtype=compute_dtype)
    return pl.pallas_call(
        kernel,
        out_shape=jax.ShapeDtypeStruct((rows, lanes), dtype),
        grid_spec=pltpu.PrefetchScalarGridSpec(
            num_scalar_prefetch=0,
            grid=grid,
            in_specs=[pl.BlockSpec((block_rows, lanes), lambda i: (i, 0))],
            out_specs=pl.BlockSpec((block_rows, lanes), lambda i: (i, 0)),
        ),
        compiler_params=pltpu.CompilerParams(**cp_kwargs),
        cost_estimate=cost,
    )(slab)


def pallas_pow(x, power):
    """Elementwise x ** power (torch.pow semantics) for any shape."""
    orig_shape = x.shape
    orig_dtype = x.dtype
    n = x.size
    itemsize = jnp.dtype(orig_dtype).itemsize

    # Sub-32-bit floats compute in f32 inside the kernel / bypass expression.
    if jnp.issubdtype(orig_dtype, jnp.floating) and itemsize < 4:
        compute_dtype = jnp.float32
    else:
        compute_dtype = orig_dtype

    # Small-input bypass: launch overhead + lost XLA fusion dominate below
    # ~256 KiB (the WENO (2,4,16,16) tensors are 8 KiB).
    if n == 0 or n * itemsize < SMALL_BYPASS_BYTES:
        return _apply_pow(x.astype(compute_dtype), power).astype(orig_dtype)

    flat = x.reshape(-1)
    n_aligned = n - (n % LANES)
    if n_aligned == n:
        # Common case: free reshape to a lane-dense slab, zero extra HBM passes.
        out = _pow_slab(flat.reshape(n // LANES, LANES), power, compute_dtype)
        return out.reshape(orig_shape)

    # Ragged tail (< 128 elements): kernel on the lane-aligned prefix, tail in
    # plain jnp, then stitch. Avoids padding the whole input before the kernel.
    head = flat[:n_aligned].reshape(n_aligned // LANES, LANES)
    tail = flat[n_aligned:]
    out_head = _pow_slab(head, power, compute_dtype).reshape(-1)
    out_tail = _apply_pow(tail.astype(compute_dtype), power).astype(orig_dtype)
    return jnp.concatenate([out_head, out_tail]).reshape(orig_shape)


class PowModule:
    """JAX mirror of _Pow. `power` is a deterministic scalar "parameter"."""

    def __init__(self, power):
        if power is None:
            # TODO(synk): torch.nn.Parameter(torch.tensor(None)) in the
            # reference module is invalid; default to a deterministic scalar.
            self.power = 2.0
        else:
            self.power = power

    def __call__(self, inputs):
        return pallas_pow(inputs, self.power)


if __name__ == "__main__":
    key = jax.random.PRNGKey(0)
    k1, k2, k3 = jax.random.split(key, 3)

    # 1) WENO-style small NCHW tensor (batch=2, channels=4, 16x16, 8 KiB):
    #    exercises the small-input bypass path.
    x_small = jax.random.normal(k1, (2, 4, 16, 16), dtype=jnp.float32)
    out_s = jax.block_until_ready(PowModule(2.0)(x_small))
    assert out_s.shape == x_small.shape and out_s.dtype == x_small.dtype
    assert jnp.allclose(out_s, x_small * x_small, atol=1e-6, rtol=1e-6)

    # 2) Larger lane-aligned tensor (512 KiB): exercises the Pallas kernel path.
    x_big = jax.random.normal(k2, (512, 256), dtype=jnp.float32)
    out2 = jax.block_until_ready(PowModule(2.0)(x_big))
    assert jnp.allclose(out2, x_big * x_big, atol=1e-6, rtol=1e-6)

    out3 = jax.block_until_ready(PowModule(3)(x_big))   # odd int, negative bases exact
    assert jnp.allclose(out3, x_big * x_big * x_big, atol=1e-5, rtol=1e-5)

    x_pos = jnp.abs(x_big) + 1e-3
    out_h = jax.block_until_ready(PowModule(0.5)(x_pos))
    assert jnp.allclose(out_h, jnp.sqrt(x_pos), atol=1e-6, rtol=1e-6)

    # 3) Ragged element count (not a multiple of 128): prefix kernel + jnp tail.
    x_rag = jax.random.normal(k3, (1000, 300), dtype=jnp.float32)
    out_r = jax.block_until_ready(PowModule(2.0)(x_rag))
    assert out_r.shape == x_rag.shape
    assert jnp.allclose(out_r, x_rag * x_rag, atol=1e-6, rtol=1e-6)

    print("KERNEL_OK")
</pallas_src>

<mosaic_0001>
module attributes {stable_mosaic.version = 11 : i64} {
  func.func @_pow_kernel(%arg0: i32, %arg1: memref<1024x128xf32, #tpu.memory_space<vmem>>, %arg2: memref<1024x128xf32, #tpu.memory_space<vmem>>) attributes {dimension_semantics = [#tpu.dimension_semantics<parallel>], iteration_bounds = array<i64: 1>, scalar_prefetch = 0 : i64, scratch_operands = 0 : i64, tpu.core_type = #tpu.core_type<tc>, window_params = [{transform_indices = @transform_0, window_bounds = array<i64: 1024, 128>}, {transform_indices = @transform_1, window_bounds = array<i64: 1024, 128>}]} {
    %c0 = arith.constant 0 : index
    %c0_0 = arith.constant 0 : index
    %0 = vector.load %arg1[%c0, %c0_0] : memref<1024x128xf32, #tpu.memory_space<vmem>>, vector<1024x128xf32>
    %1 = arith.mulf %0, %0 : vector<1024x128xf32>
    %c0_1 = arith.constant 0 : index
    %c0_2 = arith.constant 0 : index
    %2 = vector.load %arg2[%c0_1, %c0_2] : memref<1024x128xf32, #tpu.memory_space<vmem>>, vector<1024x128xf32>
    tpu.vector_store %arg2[%c0_1, %c0_2], %1 {strides = array<i32>} : memref<1024x128xf32, #tpu.memory_space<vmem>>, vector<1024x128xf32>,
    return
  }
  func.func @transform_0(%arg0: i32) -> (i32, i32) {
    %c0_i32 = arith.constant 0 : i32
    %c0_i32_0 = arith.constant 0 : i32
    return %arg0, %c0_i32 : i32, i32
  }
  func.func @transform_1(%arg0: i32) -> (i32, i32) {
    %c0_i32 = arith.constant 0 : i32
    %c0_i32_0 = arith.constant 0 : i32
    return %arg0, %c0_i32 : i32, i32
  }
}

</mosaic_0001>

<llo_original>
// kernel: tpu_custom_call.1
$region0: #{tpu_custom_call.1}
  #allocation0 [shape = 'u32[]', space=smem, size = 0x4, offset = 0x4, fixed_abs, tag = 'smem constant byte address 0x4 - core index']
  #allocation1 [shape = 'u32[144,128]{1,0:T(1,128)}', space=vmem, size = 0x12000, scoped, tag = 'internal scratch']
  %s0 = inlined_call_operand.hbm [shape: f32[1024,128], index: 0, kind: input, shape index: {}]
  %s1 = inlined_call_operand.hbm [shape: f32[1024,128], index: 1, kind: output, shape index: {}]
  %s2 = sld [smem:[#allocation0]]
  $region18: #{tpu_custom_call.1} parent=0
    _
  %s4 = ssub.s32 1, %s2
  %s5 = scalar_select 0, %s4, %s2
  $region1: #{tpu_custom_call.1} parent=0
    #allocation2 [shape = 'u8[524288]{0}', space=vmem, size = 0x80000, scoped, tag = 'input window, operand 0, single buffered']
    #allocation3 [shape = 's32[1]{0}', space=sflag, size = 0x4, scoped, tag = 'scoped memory for tpu_custom_call.1']
    #allocation4 [shape = 's32[1]{0}', space=sflag, size = 0x4, scoped, tag = 'scoped memory for tpu_custom_call.1']
    #allocation5 [shape = 'u8[524288]{0}', space=vmem, size = 0x80000, scoped, tag = 'output window, operand 0, single buffered']
    %6 = vsyncpa [#allocation3], 0
    %7 = vsyncpa [#allocation4], 0
    // Predicated region
    $region2: #{tpu_custom_call.1} parent=1 // pred_check
      _
    $region3: #{tpu_custom_call.1} parent=1 // pred_check_branch
      %9 = sbr.rel (0) target = $region5
    $region4: #{tpu_custom_call.1} parent=1 // pred_region
      %s11 = ssub.s32 16384, 16384
      %12 = vsyncadd [#allocation3], %s11
      %s13 = sshll.u32 [#allocation2], 4
      %s14 = int_to_ptr.vmem [resolvable:$true] %s13
      %19 = dma.hbm_to_vmem [thread:$0]  %s0, 16384, %s14, [#allocation3], 128, 128, 8
    $region5: #{tpu_custom_call.1} parent=1 // pred_fallthru
      _
    // Predicated region
    $region6: #{tpu_custom_call.1} parent=1 // pred_check
      _
    $region7: #{tpu_custom_call.1} parent=1 // pred_check_branch
      %21 = sbr.rel (0) target = $region9
    $region8: #{tpu_custom_call.1} parent=1 // pred_region
      %22 = dma.done [#allocation3], 16384
    $region9: #{tpu_custom_call.1} parent=1 // pred_fallthru
      _
    %v23 = vld [vmem:[#allocation2] sm:$0xff]
    %v24 = vld [vmem:[#allocation2 + $0x8] sm:$0xff]
    %v25 = vld [vmem:[#allocation2 + $0x10] sm:$0xff]
    %v26 = vld [vmem:[#allocation2 + $0x18] sm:$0xff]
    %v27 = vld [vmem:[#allocation2 + $0x20] sm:$0xff]
    %v28 = vld [vmem:[#allocation2 + $0x28] sm:$0xff]
    %v29 = vld [vmem:[#allocation2 + $0x30] sm:$0xff]
    %v30 = vld [vmem:[#allocation2 + $0x38] sm:$0xff]
    %v31 = vld [vmem:[#allocation2 + $0x40] sm:$0xff]
    %v32 = vld [vmem:[#allocation2 + $0x48] sm:$0xff]
    %v33 = vld [vmem:[#allocation2 + $0x50] sm:$0xff]
    %v34 = vld [vmem:[#allocation2 + $0x58] sm:$0xff]
    %v35 = vld [vmem:[#allocation2 + $0x60] sm:$0xff]
    %v36 = vld [vmem:[#allocation2 + $0x68] sm:$0xff]
    %v37 = vld [vmem:[#allocation2 + $0x70] sm:$0xff]
    %v38 = vld [vmem:[#allocation2 + $0x78] sm:$0xff]
    %v39 = vld [vmem:[#allocation2 + $0x80] sm:$0xff]
    %v40 = vld [vmem:[#allocation2 + $0x88] sm:$0xff]
    %v41 = vld [vmem:[#allocation2 + $0x90] sm:$0xff]
    %v42 = vld [vmem:[#allocation2 + $0x98] sm:$0xff]
    %v43 = vld [vmem:[#allocation2 + $0xa0] sm:$0xff]
    %v44 = vld [vmem:[#allocation2 + $0xa8] sm:$0xff]
    %v45 = vld [vmem:[#allocation2 + $0xb0] sm:$0xff]
    %v46 = vld [vmem:[#allocation2 + $0xb8] sm:$0xff]
    %v47 = vld [vmem:[#allocation2 + $0xc0] sm:$0xff]
    %v48 = vld [vmem:[#allocation2 + $0xc8] sm:$0xff]
    %v49 = vld [vmem:[#allocation2 + $0xd0] sm:$0xff]
    %v50 = vld [vmem:[#allocation2 + $0xd8] sm:$0xff]
    %v51 = vld [vmem:[#allocation2 + $0xe0] sm:$0xff]
    %v52 = vld [vmem:[#allocation2 + $0xe8] sm:$0xff]
    %v53 = vld [vmem:[#allocation2 + $0xf0] sm:$0xff]
    %v54 = vld [vmem:[#allocation2 + $0xf8] sm:$0xff]
    %v55 = vld [vmem:[#allocation2 + $0x100] sm:$0xff]
    %v56 = vld [vmem:[#allocation2 + $0x108] sm:$0xff]
    %v57 = vld [vmem:[#allocation2 + $0x110] sm:$0xff]
    %v58 = vld [vmem:[#allocation2 + $0x118] sm:$0xff]
    %v59 = vld [vmem:[#allocation2 + $0x120] sm:$0xff]
    %v60 = vld [vmem:[#allocation2 + $0x128] sm:$0xff]
    %v61 = vld [vmem:[#allocation2 + $0x130] sm:$0xff]
    %v62 = vld [vmem:[#allocation2 + $0x138] sm:$0xff]
    %v63 = vld [vmem:[#allocation2 + $0x140] sm:$0xff]
    %v64 = vld [vmem:[#allocation2 + $0x148] sm:$0xff]
    %v65 = vld [vmem:[#allocation2 + $0x150] sm:$0xff]
    %v66 = vld [vmem:[#allocation2 + $0x158] sm:$0xff]
    %v67 = vld [vmem:[#allocation2 + $0x160] sm:$0xff]
    %v68 = vld [vmem:[#allocation2 + $0x168] sm:$0xff]
    %v69 = vld [vmem:[#allocation2 + $0x170] sm:$0xff]
    %v70 = vld [vmem:[#allocation2 + $0x178] sm:$0xff]
    %v71 = vld [vmem:[#allocation2 + $0x180] sm:$0xff]
    %v72 = vld [vmem:[#allocation2 + $0x188] sm:$0xff]
    %v73 = vld [vmem:[#allocation2 + $0x190] sm:$0xff]
    %v74 = vld [vmem:[#allocation2 + $0x198] sm:$0xff]
    %v75 = vld [vmem:[#allocation2 + $0x1a0] sm:$0xff]
    %v76 = vld [vmem:[#allocation2 + $0x1a8] sm:$0xff]
    %v77 = vld [vmem:[#allocation2 + $0x1b0] sm:$0xff]
    %v78 = vld [vmem:[#allocation2 + $0x1b8] sm:$0xff]
    %v79 = vld [vmem:[#allocation2 + $0x1c0] sm:$0xff]
    %v80 = vld [vmem:[#allocation2 + $0x1c8] sm:$0xff]
    %v81 = vld [vmem:[#allocation2 + $0x1d0] sm:$0xff]
    %v82 = vld [vmem:[#allocation2 + $0x1d8] sm:$0xff]
    %v83 = vld [vmem:[#allocation2 + $0x1e0] sm:$0xff]
    %v84 = vld [vmem:[#allocation2 + $0x1e8] sm:$0xff]
    %v85 = vld [vmem:[#allocation2 + $0x1f0] sm:$0xff]
    %v86 = vld [vmem:[#allocation2 + $0x1f8] sm:$0xff]
    %v87 = vld [vmem:[#allocation2 + $0x200] sm:$0xff]
    %v88 = vld [vmem:[#allocation2 + $0x208] sm:$0xff]
    %v89 = vld [vmem:[#allocation2 + $0x210] sm:$0xff]
    %v90 = vld [vmem:[#allocation2 + $0x218] sm:$0xff]
    %v91 = vld [vmem:[#allocation2 + $0x220] sm:$0xff]
    %v92 = vld [vmem:[#allocation2 + $0x228] sm:$0xff]
    %v93 = vld [vmem:[#allocation2 + $0x230] sm:$0xff]
    %v94 = vld [vmem:[#allocation2 + $0x238] sm:$0xff]
    %v95 = vld [vmem:[#allocation2 + $0x240] sm:$0xff]
    %v96 = vld [vmem:[#allocation2 + $0x248] sm:$0xff]
    %v97 = vld [vmem:[#allocation2 + $0x250] sm:$0xff]
    %v98 = vld [vmem:[#allocation2 + $0x258] sm:$0xff]
    %v99 = vld [vmem:[#allocation2 + $0x260] sm:$0xff]
    %v100 = vld [vmem:[#allocation2 + $0x268] sm:$0xff]
    %v101 = vld [vmem:[#allocation2 + $0x270] sm:$0xff]
    %v102 = vld [vmem:[#allocation2 + $0x278] sm:$0xff]
    %v103 = vld [vmem:[#allocation2 + $0x280] sm:$0xff]
    %v104 = vld [vmem:[#allocation2 + $0x288] sm:$0xff]
    %v105 = vld [vmem:[#allocation2 + $0x290] sm:$0xff]
    %v106 = vld [vmem:[#allocation2 + $0x298] sm:$0xff]
    %v107 = vld [vmem:[#allocation2 + $0x2a0] sm:$0xff]
    %v108 = vld [vmem:[#allocation2 + $0x2a8] sm:$0xff]
    %v109 = vld [vmem:[#allocation2 + $0x2b0] sm:$0xff]
    %v110 = vld [vmem:[#allocation2 + $0x2b8] sm:$0xff]
    %v111 = vld [vmem:[#allocation2 + $0x2c0] sm:$0xff]
    %v112 = vld [vmem:[#allocation2 + $0x2c8] sm:$0xff]
    %v113 = vld [vmem:[#allocation2 + $0x2d0] sm:$0xff]
    %v114 = vld [vmem:[#allocation2 + $0x2d8] sm:$0xff]
    %v115 = vld [vmem:[#allocation2 + $0x2e0] sm:$0xff]
    %v116 = vld [vmem:[#allocation2 + $0x2e8] sm:$0xff]
    %v117 = vld [vmem:[#allocation2 + $0x2f0] sm:$0xff]
    %v118 = vld [vmem:[#allocation2 + $0x2f8] sm:$0xff]
    %v119 = vld [vmem:[#allocation2 + $0x300] sm:$0xff]
    %v120 = vld [vmem:[#allocation2 + $0x308] sm:$0xff]
    %v121 = vld [vmem:[#allocation2 + $0x310] sm:$0xff]
    %v122 = vld [vmem:[#allocation2 + $0x318] sm:$0xff]
    %v123 = vld [vmem:[#allocation2 + $0x320] sm:$0xff]
    %v124 = vld [vmem:[#allocation2 + $0x328] sm:$0xff]
    %v125 = vld [vmem:[#allocation2 + $0x330] sm:$0xff]
    %v126 = vld [vmem:[#allocation2 + $0x338] sm:$0xff]
    %v127 = vld [vmem:[#allocation2 + $0x340] sm:$0xff]
    %v128 = vld [vmem:[#allocation2 + $0x348] sm:$0xff]
    %v129 = vld [vmem:[#allocation2 + $0x350] sm:$0xff]
    %v130 = vld [vmem:[#allocation2 + $0x358] sm:$0xff]
    %v131 = vld [vmem:[#allocation2 + $0x360] sm:$0xff]
    %v132 = vld [vmem:[#allocation2 + $0x368] sm:$0xff]
    %v133 = vld [vmem:[#allocation2 + $0x370] sm:$0xff]
    %v134 = vld [vmem:[#allocation2 + $0x378] sm:$0xff]
    %v135 = vld [vmem:[#allocation2 + $0x380] sm:$0xff]
    %v136 = vld [vmem:[#allocation2 + $0x388] sm:$0xff]
    %v137 = vld [vmem:[#allocation2 + $0x390] sm:$0xff]
    %v138 = vld [vmem:[#allocation2 + $0x398] sm:$0xff]
    %v139 = vld [vmem:[#allocation2 + $0x3a0] sm:$0xff]
    %v140 = vld [vmem:[#allocation2 + $0x3a8] sm:$0xff]
    %v141 = vld [vmem:[#allocation2 + $0x3b0] sm:$0xff]
    %v142 = vld [vmem:[#allocation2 + $0x3b8] sm:$0xff]
    %v143 = vld [vmem:[#allocation2 + $0x3c0] sm:$0xff]
    %v144 = vld [vmem:[#allocation2 + $0x3c8] sm:$0xff]
    %v145 = vld [vmem:[#allocation2 + $0x3d0] sm:$0xff]
    %v146 = vld [vmem:[#allocation2 + $0x3d8] sm:$0xff]
    %v147 = vld [vmem:[#allocation2 + $0x3e0] sm:$0xff]
    %v148 = vld [vmem:[#allocation2 + $0x3e8] sm:$0xff]
    %v149 = vld [vmem:[#allocation2 + $0x3f0] sm:$0xff]
    %v150 = vld [vmem:[#allocation2 + $0x3f8] sm:$0xff]
    %v151 = vmul.f32 %v23, %v23
    %v152 = vmul.f32 %v24, %v24
    %v153 = vmul.f32 %v25, %v25
    %v154 = vmul.f32 %v26, %v26
    %v155 = vmul.f32 %v27, %v27
    %v156 = vmul.f32 %v28, %v28
    %v157 = vmul.f32 %v29, %v29
    %v158 = vmul.f32 %v30, %v30
    %v159 = vmul.f32 %v31, %v31
    %v160 = vmul.f32 %v32, %v32
    %v161 = vmul.f32 %v33, %v33
    %v162 = vmul.f32 %v34, %v34
    %v163 = vmul.f32 %v35, %v35
    %v164 = vmul.f32 %v36, %v36
    %v165 = vmul.f32 %v37, %v37
    %v166 = vmul.f32 %v38, %v38
    %v167 = vmul.f32 %v39, %v39
    %v168 = vmul.f32 %v40, %v40
    %v169 = vmul.f32 %v41, %v41
    %v170 = vmul.f32 %v42, %v42
    %v171 = vmul.f32 %v43, %v43
    %v172 = vmul.f32 %v44, %v44
    %v173 = vmul.f32 %v45, %v45
    %v174 = vmul.f32 %v46, %v46
    %v175 = vmul.f32 %v47, %v47
    %v176 = vmul.f32 %v48, %v48
    %v177 = vmul.f32 %v49, %v49
    %v178 = vmul.f32 %v50, %v50
    %v179 = vmul.f32 %v51, %v51
    %v180 = vmul.f32 %v52, %v52
    %v181 = vmul.f32 %v53, %v53
    %v182 = vmul.f32 %v54, %v54
    %v183 = vmul.f32 %v55, %v55
    %v184 = vmul.f32 %v56, %v56
    %v185 = vmul.f32 %v57, %v57
    %v186 = vmul.f32 %v58, %v58
    %v187 = vmul.f32 %v59, %v59
    %v188 = vmul.f32 %v60, %v60
    %v189 = vmul.f32 %v61, %v61
    %v190 = vmul.f32 %v62, %v62
    %v191 = vmul.f32 %v63, %v63
    %v192 = vmul.f32 %v64, %v64
    %v193 = vmul.f32 %v65, %v65
    %v194 = vmul.f32 %v66, %v66
    %v195 = vmul.f32 %v67, %v67
    %v196 = vmul.f32 %v68, %v68
    %v197 = vmul.f32 %v69, %v69
    %v198 = vmul.f32 %v70, %v70
    %v199 = vmul.f32 %v71, %v71
    %v200 = vmul.f32 %v72, %v72
    %v201 = vmul.f32 %v73, %v73
    %v202 = vmul.f32 %v74, %v74
    %v203 = vmul.f32 %v75, %v75
    %v204 = vmul.f32 %v76, %v76
    %v205 = vmul.f32 %v77, %v77
    %v206 = vmul.f32 %v78, %v78
    %v207 = vmul.f32 %v79, %v79
    %v208 = vmul.f32 %v80, %v80
    %v209 = vmul.f32 %v81, %v81
    %v210 = vmul.f32 %v82, %v82
    %v211 = vmul.f32 %v83, %v83
    %v212 = vmul.f32 %v84, %v84
    %v213 = vmul.f32 %v85, %v85
    %v214 = vmul.f32 %v86, %v86
    %v215 = vmul.f32 %v87, %v87
    %v216 = vmul.f32 %v88, %v88
    %v217 = vmul.f32 %v89, %v89
    %v218 = vmul.f32 %v90, %v90
    %v219 = vmul.f32 %v91, %v91
    %v220 = vmul.f32 %v92, %v92
    %v221 = vmul.f32 %v93, %v93
    %v222 = vmul.f32 %v94, %v94
    %v223 = vmul.f32 %v95, %v95
    %v224 = vmul.f32 %v96, %v96
    %v225 = vmul.f32 %v97, %v97
    %v226 = vmul.f32 %v98, %v98
    %v227 = vmul.f32 %v99, %v99
    %v228 = vmul.f32 %v100, %v100
    %v229 = vmul.f32 %v101, %v101
    %v230 = vmul.f32 %v102, %v102
    %v231 = vmul.f32 %v103, %v103
    %v232 = vmul.f32 %v104, %v104
    %v233 = vmul.f32 %v105, %v105
    %v234 = vmul.f32 %v106, %v106
    %v235 = vmul.f32 %v107, %v107
    %v236 = vmul.f32 %v108, %v108
    %v237 = vmul.f32 %v109, %v109
    %v238 = vmul.f32 %v110, %v110
    %v239 = vmul.f32 %v111, %v111
    %v240 = vmul.f32 %v112, %v112
    %v241 = vmul.f32 %v113, %v113
    %v242 = vmul.f32 %v114, %v114
    %v243 = vmul.f32 %v115, %v115
    %v244 = vmul.f32 %v116, %v116
    %v245 = vmul.f32 %v117, %v117
    %v246 = vmul.f32 %v118, %v118
    %v247 = vmul.f32 %v119, %v119
    %v248 = vmul.f32 %v120, %v120
    %v249 = vmul.f32 %v121, %v121
    %v250 = vmul.f32 %v122, %v122
    %v251 = vmul.f32 %v123, %v123
    %v252 = vmul.f32 %v124, %v124
    %v253 = vmul.f32 %v125, %v125
    %v254 = vmul.f32 %v126, %v126
    %v255 = vmul.f32 %v127, %v127
    %v256 = vmul.f32 %v128, %v128
    %v257 = vmul.f32 %v129, %v129
    %v258 = vmul.f32 %v130, %v130
    %v259 = vmul.f32 %v131, %v131
    %v260 = vmul.f32 %v132, %v132
    %v261 = vmul.f32 %v133, %v133
    %v262 = vmul.f32 %v134, %v134
    %v263 = vmul.f32 %v135, %v135
    %v264 = vmul.f32 %v136, %v136
    %v265 = vmul.f32 %v137, %v137
    %v266 = vmul.f32 %v138, %v138
    %v267 = vmul.f32 %v139, %v139
    %v268 = vmul.f32 %v140, %v140
    %v269 = vmul.f32 %v141, %v141
    %v270 = vmul.f32 %v142, %v142
    %v271 = vmul.f32 %v143, %v143
    %v272 = vmul.f32 %v144, %v144
    %v273 = vmul.f32 %v145, %v145
    %v274 = vmul.f32 %v146, %v146
    %v275 = vmul.f32 %v147, %v147
    %v276 = vmul.f32 %v148, %v148
    %v277 = vmul.f32 %v149, %v149
    %v278 = vmul.f32 %v150, %v150
    %279 = vst [vmem:[#allocation5] sm:$0xff] %v151
    %280 = vst [vmem:[#allocation5 + $0x8] sm:$0xff] %v152
    %281 = vst [vmem:[#allocation5 + $0x10] sm:$0xff] %v153
    %282 = vst [vmem:[#allocation5 + $0x18] sm:$0xff] %v154
    %283 = vst [vmem:[#allocation5 + $0x20] sm:$0xff] %v155
    %284 = vst [vmem:[#allocation5 + $0x28] sm:$0xff] %v156
    %285 = vst [vmem:[#allocation5 + $0x30] sm:$0xff] %v157
    %286 = vst [vmem:[#allocation5 + $0x38] sm:$0xff] %v158
    %287 = vst [vmem:[#allocation5 + $0x40] sm:$0xff] %v159
    %288 = vst [vmem:[#allocation5 + $0x48] sm:$0xff] %v160
    %289 = vst [vmem:[#allocation5 + $0x50] sm:$0xff] %v161
    %290 = vst [vmem:[#allocation5 + $0x58] sm:$0xff] %v162
    %291 = vst [vmem:[#allocation5 + $0x60] sm:$0xff] %v163
    %292 = vst [vmem:[#allocation5 + $0x68] sm:$0xff] %v164
    %293 = vst [vmem:[#allocation5 + $0x70] sm:$0xff] %v165
    %294 = vst [vmem:[#allocation5 + $0x78] sm:$0xff] %v166
    %295 = vst [vmem:[#allocation5 + $0x80] sm:$0xff] %v167
    %296 = vst [vmem:[#allocation5 + $0x88] sm:$0xff] %v168
    %297 = vst [vmem:[#allocation5 + $0x90] sm:$0xff] %v169
    %298 = vst [vmem:[#allocation5 + $0x98] sm:$0xff] %v170
    %299 = vst [vmem:[#allocation5 + $0xa0] sm:$0xff] %v171
    %300 = vst [vmem:[#allocation5 + $0xa8] sm:$0xff] %v172
    %301 = vst [vmem:[#allocation5 + $0xb0] sm:$0xff] %v173
    %302 = vst [vmem:[#allocation5 + $0xb8] sm:$0xff] %v174
    %303 = vst [vmem:[#allocation5 + $0xc0] sm:$0xff] %v175
    %304 = vst [vmem:[#allocation5 + $0xc8] sm:$0xff] %v176
    %305 = vst [vmem:[#allocation5 + $0xd0] sm:$0xff] %v177
    %306 = vst [vmem:[#allocation5 + $0xd8] sm:$0xff] %v178
    %307 = vst [vmem:[#allocation5 + $0xe0] sm:$0xff] %v179
    %308 = vst [vmem:[#allocation5 + $0xe8] sm:$0xff] %v180
    %309 = vst [vmem:[#allocation5 + $0xf0] sm:$0xff] %v181
    %310 = vst [vmem:[#allocation5 + $0xf8] sm:$0xff] %v182
    %311 = vst [vmem:[#allocation5 + $0x100] sm:$0xff] %v183
    %312 = vst [vmem:[#allocation5 + $0x108] sm:$0xff] %v184
    %313 = vst [vmem:[#allocation5 + $0x110] sm:$0xff] %v185
    %314 = vst [vmem:[#allocation5 + $0x118] sm:$0xff] %v186
    %315 = vst [vmem:[#allocation5 + $0x120] sm:$0xff] %v187
    %316 = vst [vmem:[#allocation5 + $0x128] sm:$0xff] %v188
    %317 = vst [vmem:[#allocation5 + $0x130] sm:$0xff] %v189
    %318 = vst [vmem:[#allocation5 + $0x138] sm:$0xff] %v190
    %319 = vst [vmem:[#allocation5 + $0x140] sm:$0xff] %v191
    %320 = vst [vmem:[#allocation5 + $0x148] sm:$0xff] %v192
    %321 = vst [vmem:[#allocation5 + $0x150] sm:$0xff] %v193
    %322 = vst [vmem:[#allocation5 + $0x158] sm:$0xff] %v194
    %323 = vst [vmem:[#allocation5 + $0x160] sm:$0xff] %v195
    %324 = vst [vmem:[#allocation5 + $0x168] sm:$0xff] %v196
    %325 = vst [vmem:[#allocation5 + $0x170] sm:$0xff] %v197
    %326 = vst [vmem:[#allocation5 + $0x178] sm:$0xff] %v198
    %327 = vst [vmem:[#allocation5 + $0x180] sm:$0xff] %v199
    %328 = vst [vmem:[#allocation5 + $0x188] sm:$0xff] %v200
    %329 = vst [vmem:[#allocation5 + $0x190] sm:$0xff] %v201
    %330 = vst [vmem:[#allocation5 + $0x198] sm:$0xff] %v202
    %331 = vst [vmem:[#allocation5 + $0x1a0] sm:$0xff] %v203
    %332 = vst [vmem:[#allocation5 + $0x1a8] sm:$0xff] %v204
    %333 = vst [vmem:[#allocation5 + $0x1b0] sm:$0xff] %v205
    %334 = vst [vmem:[#allocation5 + $0x1b8] sm:$0xff] %v206
    %335 = vst [vmem:[#allocation5 + $0x1c0] sm:$0xff] %v207
    %336 = vst [vmem:[#allocation5 + $0x1c8] sm:$0xff] %v208
    %337 = vst [vmem:[#allocation5 + $0x1d0] sm:$0xff] %v209
    %338 = vst [vmem:[#allocation5 + $0x1d8] sm:$0xff] %v210
    %339 = vst [vmem:[#allocation5 + $0x1e0] sm:$0xff] %v211
    %340 = vst [vmem:[#allocation5 + $0x1e8] sm:$0xff] %v212
    %341 = vst [vmem:[#allocation5 + $0x1f0] sm:$0xff] %v213
    %342 = vst [vmem:[#allocation5 + $0x1f8] sm:$0xff] %v214
    %343 = vst [vmem:[#allocation5 + $0x200] sm:$0xff] %v215
    %344 = vst [vmem:[#allocation5 + $0x208] sm:$0xff] %v216
    %345 = vst [vmem:[#allocation5 + $0x210] sm:$0xff] %v217
    %346 = vst [vmem:[#allocation5 + $0x218] sm:$0xff] %v218
    %347 = vst [vmem:[#allocation5 + $0x220] sm:$0xff] %v219
    %348 = vst [vmem:[#allocation5 + $0x228] sm:$0xff] %v220
    %349 = vst [vmem:[#allocation5 + $0x230] sm:$0xff] %v221
    %350 = vst [vmem:[#allocation5 + $0x238] sm:$0xff] %v222
    %351 = vst [vmem:[#allocation5 + $0x240] sm:$0xff] %v223
    %352 = vst [vmem:[#allocation5 + $0x248] sm:$0xff] %v224
    %353 = vst [vmem:[#allocation5 + $0x250] sm:$0xff] %v225
    %354 = vst [vmem:[#allocation5 + $0x258] sm:$0xff] %v226
    %355 = vst [vmem:[#allocation5 + $0x260] sm:$0xff] %v227
    %356 = vst [vmem:[#allocation5 + $0x268] sm:$0xff] %v228
    %357 = vst [vmem:[#allocation5 + $0x270] sm:$0xff] %v229
    %358 = vst [vmem:[#allocation5 + $0x278] sm:$0xff] %v230
    %359 = vst [vmem:[#allocation5 + $0x280] sm:$0xff] %v231
    %360 = vst [vmem:[#allocation5 + $0x288] sm:$0xff] %v232
    %361 = vst [vmem:[#allocation5 + $0x290] sm:$0xff] %v233
    %362 = vst [vmem:[#allocation5 + $0x298] sm:$0xff] %v234
    %363 = vst [vmem:[#allocation5 + $0x2a0] sm:$0xff] %v235
    %364 = vst [vmem:[#allocation5 + $0x2a8] sm:$0xff] %v236
    %365 = vst [vmem:[#allocation5 + $0x2b0] sm:$0xff] %v237
    %366 = vst [vmem:[#allocation5 + $0x2b8] sm:$0xff] %v238
    %367 = vst [vmem:[#allocation5 + $0x2c0] sm:$0xff] %v239
    %368 = vst [vmem:[#allocation5 + $0x2c8] sm:$0xff] %v240
    %369 = vst [vmem:[#allocation5 + $0x2d0] sm:$0xff] %v241
    %370 = vst [vmem:[#allocation5 + $0x2d8] sm:$0xff] %v242
    %371 = vst [vmem:[#allocation5 + $0x2e0] sm:$0xff] %v243
    %372 = vst [vmem:[#allocation5 + $0x2e8] sm:$0xff] %v244
    %373 = vst [vmem:[#allocation5 + $0x2f0] sm:$0xff] %v245
    %374 = vst [vmem:[#allocation5 + $0x2f8] sm:$0xff] %v246
    %375 = vst [vmem:[#allocation5 + $0x300] sm:$0xff] %v247
    %376 = vst [vmem:[#allocation5 + $0x308] sm:$0xff] %v248
    %377 = vst [vmem:[#allocation5 + $0x310] sm:$0xff] %v249
    %378 = vst [vmem:[#allocation5 + $0x318] sm:$0xff] %v250
    %379 = vst [vmem:[#allocation5 + $0x320] sm:$0xff] %v251
    %380 = vst [vmem:[#allocation5 + $0x328] sm:$0xff] %v252
    %381 = vst [vmem:[#allocation5 + $0x330] sm:$0xff] %v253
    %382 = vst [vmem:[#allocation5 + $0x338] sm:$0xff] %v254
    %383 = vst [vmem:[#allocation5 + $0x340] sm:$0xff] %v255
    %384 = vst [vmem:[#allocation5 + $0x348] sm:$0xff] %v256
    %385 = vst [vmem:[#allocation5 + $0x350] sm:$0xff] %v257
    %386 = vst [vmem:[#allocation5 + $0x358] sm:$0xff] %v258
    %387 = vst [vmem:[#allocation5 + $0x360] sm:$0xff] %v259
    %388 = vst [vmem:[#allocation5 + $0x368] sm:$0xff] %v260
    %389 = vst [vmem:[#allocation5 + $0x370] sm:$0xff] %v261
    %390 = vst [vmem:[#allocation5 + $0x378] sm:$0xff] %v262
    %391 = vst [vmem:[#allocation5 + $0x380] sm:$0xff] %v263
    %392 = vst [vmem:[#allocation5 + $0x388] sm:$0xff] %v264
    %393 = vst [vmem:[#allocation5 + $0x390] sm:$0xff] %v265
    %394 = vst [vmem:[#allocation5 + $0x398] sm:$0xff] %v266
    %395 = vst [vmem:[#allocation5 + $0x3a0] sm:$0xff] %v267
    %396 = vst [vmem:[#allocation5 + $0x3a8] sm:$0xff] %v268
    %397 = vst [vmem:[#allocation5 + $0x3b0] sm:$0xff] %v269
    %398 = vst [vmem:[#allocation5 + $0x3b8] sm:$0xff] %v270
    %399 = vst [vmem:[#allocation5 + $0x3c0] sm:$0xff] %v271
    %400 = vst [vmem:[#allocation5 + $0x3c8] sm:$0xff] %v272
    %401 = vst [vmem:[#allocation5 + $0x3d0] sm:$0xff] %v273
    %402 = vst [vmem:[#allocation5 + $0x3d8] sm:$0xff] %v274
    %403 = vst [vmem:[#allocation5 + $0x3e0] sm:$0xff] %v275
    %404 = vst [vmem:[#allocation5 + $0x3e8] sm:$0xff] %v276
    %405 = vst [vmem:[#allocation5 + $0x3f0] sm:$0xff] %v277
    %406 = vst [vmem:[#allocation5 + $0x3f8] sm:$0xff] %v278
    // Predicated region
    $region10: #{tpu_custom_call.1} parent=1 // pred_check
      _
    $region11: #{tpu_custom_call.1} parent=1 // pred_check_branch
      %408 = sbr.rel (0) target = $region13
    $region12: #{tpu_custom_call.1} parent=1 // pred_region
      %s410 = ssub.s32 16384, 16384
      %411 = vsyncadd [#allocation4], %s410
      %s412 = sshll.u32 [#allocation5], 4
      %s413 = int_to_ptr.vmem [resolvable:$true] %s412
      %418 = dma.vmem_to_hbm [thread:$0]  %s413, 16384, %s1, [#allocation4], 128, 128, 8
    $region13: #{tpu_custom_call.1} parent=1 // pred_fallthru
      _
    // Predicated region
    $region14: #{tpu_custom_call.1} parent=1 // pred_check
      _
    $region15: #{tpu_custom_call.1} parent=1 // pred_check_branch
      %420 = sbr.rel (0) target = $region17
    $region16: #{tpu_custom_call.1} parent=1 // pred_region
      %421 = dma.done [#allocation4], 16384
    $region17: #{tpu_custom_call.1} parent=1 // pred_fallthru
      _
    %422 = vsyncpa [#allocation3], 1
    %423 = vsyncpa [#allocation4], 1

</llo_original>
